<compile_context>
chip_gen: v6e
topology: v6e:2x2x1
jax: 0.10.0
libtpu: 0.0.40
codegen_flags: <defaults>
</compile_context>

<pallas_src>
import jax
import jax.numpy as jnp
from jax.experimental import pallas as pl
from jax.experimental.pallas import tpu as pltpu

# Real (unpadded) head widths (stand-ins for config.INFO label counts).
N_DAILY, N_GENDER, N_EMBEL = 6, 5, 3
FEAT_DIM = 32            # synthetic backbone feature width (timm in_features stand-in)
LANE = 128               # only the packed head output is padded to lane width
VMEM_BUDGET_BYTES = 12 * 1024 * 1024   # conservative: fits v5e's 16 MiB scoped default


def _round_up(n, m):
    return ((n + m - 1) // m) * m


# ----------------------------------------------------------------------------
# Fused kernel: one grid step processes S samples.
#   patches_ref: (S, HW, KKC) bf16     conv_w_ref: (KKC, F) bf16
#   conv_b_ref:  (1, F) f32            heads_w_ref: (F, NH_pad) f32 (pre-scaled by 1/HW)
#   heads_b_ref: (1, NH_pad) f32       logits_ref: (S, NH_pad) f32
# ----------------------------------------------------------------------------
def _fused_kernel(patches_ref, conv_w_ref, conv_b_ref,
                  heads_w_ref, heads_b_ref, logits_ref):
    S, HW, KKC = patches_ref.shape
    F = conv_w_ref.shape[1]

    # Backbone: conv-as-matmul over all S*HW patch rows in one bf16 MXU pass
    # (f32 accumulation), then bias + ReLU in f32.
    p = patches_ref[...].reshape(S * HW, KKC)
    y = jnp.dot(p, conv_w_ref[...], preferred_element_type=jnp.float32)
    y = jnp.maximum(y + conv_b_ref[...], 0.0)

    # Global average pool: plain per-sample sum; the 1/HW scale is folded into
    # heads_w at init, so no extra VPU multiply here.
    summed = jnp.sum(y.reshape(S, HW, F), axis=1)            # (S, F) f32

    # All three heads fused as one packed, lane-dense matmul + unmasked store.
    logits = jnp.dot(summed, heads_w_ref[...],
                     preferred_element_type=jnp.float32) + heads_b_ref[...]
    logits_ref[...] = logits


def _pick_samples_per_step(batch, hw, kkc, feat, nh,
                           vmem_budget_bytes=VMEM_BUDGET_BYTES):
    """Largest legal S (divisor of batch; S == batch or S % 8 == 0 so the
    (S, NH) output block satisfies the sublane rule) whose double-buffered
    working set fits the VMEM budget.  Small batches -> one grid step (best on
    single-TC v5e/v6e); large batches split into several 'parallel' steps that
    v7x can shard across its two TensorCores."""
    const_bytes = 2 * (kkc * feat * 2 + feat * 4 + feat * nh * 4 + nh * 4)

    def fits(s):
        patches = 2 * (s * hw * kkc * 2)      # bf16 streamed tile, double-buffered
        out = 2 * (s * nh * 4)
        return patches + out + const_bytes <= vmem_budget_bytes

    candidates = [s for s in range(1, batch + 1)
                  if batch % s == 0 and (s == batch or s % 8 == 0)]
    fitting = [s for s in candidates if fits(s)]
    return max(fitting) if fitting else min(candidates)


def fused_forward(patches, conv_w, conv_b, heads_w, heads_b):
    """patches: (B, HW, KKC) bf16 -> packed logits (B, NH_pad) f32."""
    B, HW, KKC = patches.shape
    F = conv_w.shape[1]
    NH = heads_w.shape[1]
    S = _pick_samples_per_step(B, HW, KKC, F, NH)
    G = B // S

    return pl.pallas_call(
        _fused_kernel,
        out_shape=jax.ShapeDtypeStruct((B, NH), jnp.float32),
        grid_spec=pltpu.PrefetchScalarGridSpec(
            num_scalar_prefetch=0,
            grid=(G,),
            in_specs=[
                # Streamed operand: natural 36-lane depth (== full array dim).
                pl.BlockSpec((S, HW, KKC), lambda g: (g, 0, 0)),
                # Constants: full-array blocks, index_map invariant in g.
                pl.BlockSpec((KKC, F), lambda g: (0, 0)),
                pl.BlockSpec((1, F), lambda g: (0, 0)),
                pl.BlockSpec((F, NH), lambda g: (0, 0)),
                pl.BlockSpec((1, NH), lambda g: (0, 0)),
            ],
            # Direct lane-dense 2-D store, no wrapper reshape.
            out_specs=pl.BlockSpec((S, NH), lambda g: (g, 0)),
        ),
        compiler_params=pltpu.CompilerParams(
            dimension_semantics=("parallel",),
            vmem_limit_bytes=VMEM_BUDGET_BYTES + (4 << 20)),
    )(patches, conv_w, conv_b, heads_w, heads_b)


# ----------------------------------------------------------------------------
# Wrapper-side im2col (pure reshuffle) at natural depth 9*C; bf16 output.
# ----------------------------------------------------------------------------
def _im2col_3x3_same(x_nchw, dtype=jnp.bfloat16):
    """x: (B, C, H, W) -> (B, H*W, 9*C); 3x3 kernel, stride 1, padding 1."""
    B, C, H, W = x_nchw.shape
    xp = jnp.pad(x_nchw, ((0, 0), (0, 0), (1, 1), (1, 1)))
    cols = [xp[:, :, dy:dy + H, dx:dx + W] for dy in range(3) for dx in range(3)]
    patches = jnp.stack(cols, axis=1).reshape(B, 9 * C, H * W)   # (B, 9C, HW)
    patches = jnp.transpose(patches, (0, 2, 1))                  # (B, HW, 9C)
    return patches.astype(dtype)


@jax.jit
def etri_forward(x, params):
    patches = _im2col_3x3_same(x)
    logits = fused_forward(patches, params["conv_w"], params["conv_b"],
                           params["heads_w"], params["heads_b"])
    n12 = N_DAILY + N_GENDER
    l1 = logits[:, :N_DAILY]
    l2 = logits[:, N_DAILY:n12]
    l3 = logits[:, n12:n12 + N_EMBEL]
    return l1, l2, l3


def init_params(key, c_in=4, feat_dim=FEAT_DIM, hw=16 * 16,
                n1=N_DAILY, n2=N_GENDER, n3=N_EMBEL):
    """Synthetic backbone + head params, pre-packed / pre-scaled / pre-padded."""
    ks = jax.random.split(key, 8)
    scale = 0.05
    kkc = 9 * c_in
    nh_pad = _round_up(n1 + n2 + n3, LANE)

    # Raw (PyTorch-layout) params.
    # TODO(synk): loading real PyTorch conv weights would require reordering:
    # im2col columns here are (tap-major, then channel), not (Cin, kh, kw).
    conv_w = scale * jax.random.normal(ks[0], (kkc, feat_dim), jnp.float32)
    conv_b = scale * jax.random.normal(ks[1], (feat_dim,), jnp.float32)
    daily_w = scale * jax.random.normal(ks[2], (n1, feat_dim), jnp.float32)
    daily_b = scale * jax.random.normal(ks[3], (n1,), jnp.float32)
    gender_w = scale * jax.random.normal(ks[4], (n2, feat_dim), jnp.float32)
    gender_b = scale * jax.random.normal(ks[5], (n2,), jnp.float32)
    embel_w = scale * jax.random.normal(ks[6], (n3, feat_dim), jnp.float32)
    embel_b = scale * jax.random.normal(ks[7], (n3,), jnp.float32)

    # Pack the three heads lane-dense and fold the 1/HW average-pool scale in.
    heads_w = jnp.concatenate([daily_w.T, gender_w.T, embel_w.T], axis=1) * (1.0 / hw)
    heads_b = jnp.concatenate([daily_b, gender_b, embel_b])[None, :]
    heads_w = jnp.pad(heads_w, ((0, 0), (0, nh_pad - heads_w.shape[1])))
    heads_b = jnp.pad(heads_b, ((0, 0), (0, nh_pad - heads_b.shape[1])))

    return {
        "conv_w": conv_w.astype(jnp.bfloat16),   # (36, F)  bf16 MXU operand
        "conv_b": conv_b[None, :],               # (1, F)   f32
        "heads_w": heads_w,                      # (F, 128) f32, pre-scaled by 1/HW
        "heads_b": heads_b,                      # (1, 128) f32
    }


def _ref_forward(x, params):
    """Pure-JAX reference using the same bf16 quantization of the streamed ops."""
    patches = _im2col_3x3_same(x).astype(jnp.float32)
    conv_w = params["conv_w"].astype(jnp.float32)
    y = jnp.einsum("bpk,kf->bpf", patches, conv_w,
                   precision=jax.lax.Precision.HIGHEST) + params["conv_b"]
    y = jnp.maximum(y, 0.0)
    feats = jnp.sum(y, axis=1)                   # 1/HW already folded into heads_w
    logits = jnp.dot(feats, params["heads_w"],
                     precision=jax.lax.Precision.HIGHEST) + params["heads_b"]
    n12 = N_DAILY + N_GENDER
    return (logits[:, :N_DAILY], logits[:, N_DAILY:n12],
            logits[:, n12:n12 + N_EMBEL])


if __name__ == "__main__":
    key = jax.random.PRNGKey(0)
    kx, kp = jax.random.split(key)

    B, C, H, W = 2, 4, 16, 16
    x = jax.random.normal(kx, (B, C, H, W), jnp.float32)
    params = init_params(kp, c_in=C, hw=H * W)

    l1, l2, l3 = etri_forward(x, params)
    jax.block_until_ready((l1, l2, l3))

    assert l1.shape == (B, N_DAILY)
    assert l2.shape == (B, N_GENDER)
    assert l3.shape == (B, N_EMBEL)
    assert bool(jnp.all(jnp.isfinite(l1)))
    assert bool(jnp.all(jnp.isfinite(l2)))
    assert bool(jnp.all(jnp.isfinite(l3)))

    # Correctness vs. pure-JAX reference.
    r1, r2, r3 = _ref_forward(x, params)
    assert bool(jnp.allclose(l1, r1, atol=1e-2, rtol=1e-2))
    assert bool(jnp.allclose(l2, r2, atol=1e-2, rtol=1e-2))
    assert bool(jnp.allclose(l3, r3, atol=1e-2, rtol=1e-2))

    print("KERNEL_OK")
</pallas_src>

<mosaic_0001>
module attributes {stable_mosaic.version = 11 : i64} {
  func.func @_fused_kernel(%arg0: i32, %arg1: memref<2x256x36xbf16, #tpu.memory_space<vmem>>, %arg2: memref<36x32xbf16, #tpu.memory_space<vmem>>, %arg3: memref<1x32xf32, #tpu.memory_space<vmem>>, %arg4: memref<32x128xf32, #tpu.memory_space<vmem>>, %arg5: memref<1x128xf32, #tpu.memory_space<vmem>>, %arg6: memref<2x128xf32, #tpu.memory_space<vmem>>) attributes {dimension_semantics = [#tpu.dimension_semantics<parallel>], iteration_bounds = array<i64: 1>, scalar_prefetch = 0 : i64, scratch_operands = 0 : i64, tpu.core_type = #tpu.core_type<tc>, window_params = [{transform_indices = @transform_0, window_bounds = array<i64: 2, 256, 36>}, {pipeline_mode = #tpu.pipeline_mode<synchronous>, transform_indices = @transform_1, window_bounds = array<i64: 36, 32>}, {pipeline_mode = #tpu.pipeline_mode<synchronous>, transform_indices = @transform_2, window_bounds = array<i64: 1, 32>}, {pipeline_mode = #tpu.pipeline_mode<synchronous>, transform_indices = @transform_3, window_bounds = array<i64: 32, 128>}, {pipeline_mode = #tpu.pipeline_mode<synchronous>, transform_indices = @transform_4, window_bounds = array<i64: 1, 128>}, {transform_indices = @transform_5, window_bounds = array<i64: 2, 128>}]} {
    %c0 = arith.constant 0 : index
    %c0_0 = arith.constant 0 : index
    %c0_1 = arith.constant 0 : index
    %0 = vector.load %arg1[%c0, %c0_0, %c0_1] : memref<2x256x36xbf16, #tpu.memory_space<vmem>>, vector<2x256x36xbf16>
    %1 = vector.shape_cast %0 : vector<2x256x36xbf16> to vector<512x36xbf16>
    %c0_2 = arith.constant 0 : index
    %c0_3 = arith.constant 0 : index
    %2 = vector.load %arg2[%c0_2, %c0_3] : memref<36x32xbf16, #tpu.memory_space<vmem>>, vector<36x32xbf16>
    %cst = arith.constant dense<0.000000e+00> : vector<512x32xf32>
    %3 = tpu.matmul %1, %2, %cst {dimension_numbers = #tpu.dot_dimension_numbers<[1], [0], [0], [1], [0, 0, 1, 1], [], []>} : vector<512x36xbf16>, vector<36x32xbf16>, vector<512x32xf32> -> vector<512x32xf32>
    %c0_4 = arith.constant 0 : index
    %c0_5 = arith.constant 0 : index
    %4 = vector.load %arg3[%c0_4, %c0_5] : memref<1x32xf32, #tpu.memory_space<vmem>>, vector<1x32xf32>
    %5 = vector.broadcast %4 : vector<1x32xf32> to vector<512x32xf32>
    %6 = arith.addf %3, %5 : vector<512x32xf32>
    %cst_6 = arith.constant 0.000000e+00 : f32
    %7 = vector.broadcast %cst_6 : f32 to vector<512x32xf32>
    %8 = arith.maximumf %6, %7 : vector<512x32xf32>
    %9 = vector.shape_cast %8 : vector<512x32xf32> to vector<2x256x32xf32>
    %cst_7 = arith.constant dense<0.000000e+00> : vector<2x32xf32>
    %10 = vector.multi_reduction <add>, %9, %cst_7 [1] : vector<2x256x32xf32> to vector<2x32xf32>
    %c0_8 = arith.constant 0 : index
    %c0_9 = arith.constant 0 : index
    %11 = vector.load %arg4[%c0_8, %c0_9] : memref<32x128xf32, #tpu.memory_space<vmem>>, vector<32x128xf32>
    %cst_10 = arith.constant dense<0.000000e+00> : vector<2x128xf32>
    %12 = tpu.matmul %10, %11, %cst_10 {dimension_numbers = #tpu.dot_dimension_numbers<[1], [0], [0], [1], [0, 0, 1, 1], [], []>} : vector<2x32xf32>, vector<32x128xf32>, vector<2x128xf32> -> vector<2x128xf32>
    %c0_11 = arith.constant 0 : index
    %c0_12 = arith.constant 0 : index
    %13 = vector.load %arg5[%c0_11, %c0_12] : memref<1x128xf32, #tpu.memory_space<vmem>>, vector<1x128xf32>
    %14 = vector.broadcast %13 : vector<1x128xf32> to vector<2x128xf32>
    %15 = arith.addf %12, %14 : vector<2x128xf32>
    %c0_13 = arith.constant 0 : index
    %c0_14 = arith.constant 0 : index
    %16 = vector.load %arg6[%c0_13, %c0_14] : memref<2x128xf32, #tpu.memory_space<vmem>>, vector<2x128xf32>
    tpu.vector_store %arg6[%c0_13, %c0_14], %15 {strides = array<i32>} : memref<2x128xf32, #tpu.memory_space<vmem>>, vector<2x128xf32>,
    return
  }
  func.func @transform_0(%arg0: i32) -> (i32, i32, i32) {
    %c0_i32 = arith.constant 0 : i32
    %c0_i32_0 = arith.constant 0 : i32
    %c0_i32_1 = arith.constant 0 : i32
    return %arg0, %c0_i32, %c0_i32_0 : i32, i32, i32
  }
  func.func @transform_1(%arg0: i32) -> (i32, i32) {
    %c0_i32 = arith.constant 0 : i32
    %c0_i32_0 = arith.constant 0 : i32
    %c0_i32_1 = arith.constant 0 : i32
    return %c0_i32, %c0_i32_0 : i32, i32
  }
  func.func @transform_2(%arg0: i32) -> (i32, i32) {
    %c0_i32 = arith.constant 0 : i32
    %c0_i32_0 = arith.constant 0 : i32
    %c0_i32_1 = arith.constant 0 : i32
    return %c0_i32, %c0_i32_0 : i32, i32
  }
  func.func @transform_3(%arg0: i32) -> (i32, i32) {
    %c0_i32 = arith.constant 0 : i32
    %c0_i32_0 = arith.constant 0 : i32
    %c0_i32_1 = arith.constant 0 : i32
    return %c0_i32, %c0_i32_0 : i32, i32
  }
  func.func @transform_4(%arg0: i32) -> (i32, i32) {
    %c0_i32 = arith.constant 0 : i32
    %c0_i32_0 = arith.constant 0 : i32
    %c0_i32_1 = arith.constant 0 : i32
    return %c0_i32, %c0_i32_0 : i32, i32
  }
  func.func @transform_5(%arg0: i32) -> (i32, i32) {
    %c0_i32 = arith.constant 0 : i32
    %c0_i32_0 = arith.constant 0 : i32
    return %arg0, %c0_i32 : i32, i32
  }
}

</mosaic_0001>

<llo_original>
// kernel: etri_forward.1
$region0: #{etri_forward.1}
  #allocation0 [shape = 'u32[]', space=smem, size = 0x4, offset = 0x4, fixed_abs, tag = 'smem constant byte address 0x4 - core index']
  #allocation1 [shape = 'u32[144,128]{1,0:T(1,128)}', space=vmem, size = 0x12000, scoped, tag = 'internal scratch']
  %s0 = inlined_call_operand.vmem [shape: bf16[2,256,36], index: 0, kind: input, shape index: {}]
  %s1 = inlined_call_operand.vmem [shape: bf16[36,32], index: 1, kind: input, shape index: {}]
  %s2 = inlined_call_operand.vmem [shape: f32[1,32], index: 2, kind: input, shape index: {}]
  %s3 = inlined_call_operand.vmem [shape: f32[32,128], index: 3, kind: input, shape index: {}]
  %s4 = inlined_call_operand.vmem [shape: f32[1,128], index: 4, kind: input, shape index: {}]
  %s5 = inlined_call_operand.vmem [shape: f32[2,128], index: 5, kind: output, shape index: {}]
  %s6 = sld [smem:[#allocation0]]
  $region30: #{etri_forward.1} parent=0
    _
  %s8 = ssub.s32 1, %s6
  %s9 = scalar_select 0, %s8, %s6
  // Predicated region
  $region2: #{etri_forward.1} parent=0 // pred_check
    _
  $region3: #{etri_forward.1} parent=0 // pred_check_branch
    %11 = sbr.rel (0) target = $region5
  $region4: #{etri_forward.1} parent=0 // pred_region
    _
  $region5: #{etri_forward.1} parent=0 // pred_fallthru
    _
  // Predicated region
  $region6: #{etri_forward.1} parent=0 // pred_check
    _
  $region7: #{etri_forward.1} parent=0 // pred_check_branch
    %13 = sbr.rel (0) target = $region9
  $region8: #{etri_forward.1} parent=0 // pred_region
    _
  $region9: #{etri_forward.1} parent=0 // pred_fallthru
    _
  // Predicated region
  $region10: #{etri_forward.1} parent=0 // pred_check
    _
  $region11: #{etri_forward.1} parent=0 // pred_check_branch
    %15 = sbr.rel (0) target = $region13
  $region12: #{etri_forward.1} parent=0 // pred_region
    _
  $region13: #{etri_forward.1} parent=0 // pred_fallthru
    _
  // Predicated region
  $region14: #{etri_forward.1} parent=0 // pred_check
    _
  $region15: #{etri_forward.1} parent=0 // pred_check_branch
    %17 = sbr.rel (0) target = $region17
  $region16: #{etri_forward.1} parent=0 // pred_region
    _
  $region17: #{etri_forward.1} parent=0 // pred_fallthru
    _
  // Predicated region
  $region18: #{etri_forward.1} parent=0 // pred_check
    _
  $region19: #{etri_forward.1} parent=0 // pred_check_branch
    %19 = sbr.rel (0) target = $region21
  $region20: #{etri_forward.1} parent=0 // pred_region
    _
  $region21: #{etri_forward.1} parent=0 // pred_fallthru
    _
  %v21 = vld [vmem:[%s0] sm:$0xf]
  %v22 = vld [vmem:[%s0 + $0x4] sm:$0xf]
  %v23 = vld [vmem:[%s0 + $0x8] sm:$0xf]
  %v24 = vld [vmem:[%s0 + $0xc] sm:$0xf]
  %v25 = vld [vmem:[%s0 + $0x10] sm:$0xf]
  %v26 = vld [vmem:[%s0 + $0x14] sm:$0xf]
  %v27 = vld [vmem:[%s0 + $0x18] sm:$0xf]
  %v28 = vld [vmem:[%s0 + $0x1c] sm:$0xf]
  %v29 = vld [vmem:[%s0 + $0x20] sm:$0xf]
  %v30 = vld [vmem:[%s0 + $0x24] sm:$0xf]
  %v31 = vld [vmem:[%s0 + $0x28] sm:$0xf]
  %v32 = vld [vmem:[%s0 + $0x2c] sm:$0xf]
  %v33 = vld [vmem:[%s0 + $0x30] sm:$0xf]
  %v34 = vld [vmem:[%s0 + $0x34] sm:$0xf]
  %v35 = vld [vmem:[%s0 + $0x38] sm:$0xf]
  %v36 = vld [vmem:[%s0 + $0x3c] sm:$0xf]
  %v37 = vld [vmem:[%s0 + $0x40] sm:$0xf]
  %v38 = vld [vmem:[%s0 + $0x44] sm:$0xf]
  %v39 = vld [vmem:[%s0 + $0x48] sm:$0xf]
  %v40 = vld [vmem:[%s0 + $0x4c] sm:$0xf]
  %v41 = vld [vmem:[%s0 + $0x50] sm:$0xf]
  %v42 = vld [vmem:[%s0 + $0x54] sm:$0xf]
  %v43 = vld [vmem:[%s0 + $0x58] sm:$0xf]
  %v44 = vld [vmem:[%s0 + $0x5c] sm:$0xf]
  %v45 = vld [vmem:[%s0 + $0x60] sm:$0xf]
  %v46 = vld [vmem:[%s0 + $0x64] sm:$0xf]
  %v47 = vld [vmem:[%s0 + $0x68] sm:$0xf]
  %v48 = vld [vmem:[%s0 + $0x6c] sm:$0xf]
  %v49 = vld [vmem:[%s0 + $0x70] sm:$0xf]
  %v50 = vld [vmem:[%s0 + $0x74] sm:$0xf]
  %v51 = vld [vmem:[%s0 + $0x78] sm:$0xf]
  %v52 = vld [vmem:[%s0 + $0x7c] sm:$0xf]
  %v53 = vld [vmem:[%s0 + $0x80] sm:$0xf]
  %v54 = vld [vmem:[%s0 + $0x84] sm:$0xf]
  %v55 = vld [vmem:[%s0 + $0x88] sm:$0xf]
  %v56 = vld [vmem:[%s0 + $0x8c] sm:$0xf]
  %v57 = vld [vmem:[%s0 + $0x90] sm:$0xf]
  %v58 = vld [vmem:[%s0 + $0x94] sm:$0xf]
  %v59 = vld [vmem:[%s0 + $0x98] sm:$0xf]
  %v60 = vld [vmem:[%s0 + $0x9c] sm:$0xf]
  %v61 = vld [vmem:[%s0 + $0xa0] sm:$0xf]
  %v62 = vld [vmem:[%s0 + $0xa4] sm:$0xf]
  %v63 = vld [vmem:[%s0 + $0xa8] sm:$0xf]
  %v64 = vld [vmem:[%s0 + $0xac] sm:$0xf]
  %v65 = vld [vmem:[%s0 + $0xb0] sm:$0xf]
  %v66 = vld [vmem:[%s0 + $0xb4] sm:$0xf]
  %v67 = vld [vmem:[%s0 + $0xb8] sm:$0xf]
  %v68 = vld [vmem:[%s0 + $0xbc] sm:$0xf]
  %v69 = vld [vmem:[%s0 + $0xc0] sm:$0xf]
  %v70 = vld [vmem:[%s0 + $0xc4] sm:$0xf]
  %v71 = vld [vmem:[%s0 + $0xc8] sm:$0xf]
  %v72 = vld [vmem:[%s0 + $0xcc] sm:$0xf]
  %v73 = vld [vmem:[%s0 + $0xd0] sm:$0xf]
  %v74 = vld [vmem:[%s0 + $0xd4] sm:$0xf]
  %v75 = vld [vmem:[%s0 + $0xd8] sm:$0xf]
  %v76 = vld [vmem:[%s0 + $0xdc] sm:$0xf]
  %v77 = vld [vmem:[%s0 + $0xe0] sm:$0xf]
  %v78 = vld [vmem:[%s0 + $0xe4] sm:$0xf]
  %v79 = vld [vmem:[%s0 + $0xe8] sm:$0xf]
  %v80 = vld [vmem:[%s0 + $0xec] sm:$0xf]
  %v81 = vld [vmem:[%s0 + $0xf0] sm:$0xf]
  %v82 = vld [vmem:[%s0 + $0xf4] sm:$0xf]
  %v83 = vld [vmem:[%s0 + $0xf8] sm:$0xf]
  %v84 = vld [vmem:[%s0 + $0xfc] sm:$0xf]
  %v85 = vld [vmem:[%s1] sm:$0xf]
  %v86 = vld [vmem:[%s1 + $0x4] sm:$0xf]
  %v87 = vld [vmem:[%s1 + $0x8] sm:$0xf]
  %v88 = vld [vmem:[%s1 + $0xc] sm:$0xf]
  %v89 = vld [vmem:[%s1 + $0x10] sm:$0x3]
  %v90 = vld [vmem:[%s2] sm:$0x1]
  %v92 = vlaneseq
  %v93 = vshrl.u32 %v92, 7
  %v94 = vsub.s32 0, %v93
  %v95 = vrot.slane %v90, %v94
  %v161 = vunpack.c.l.b16 %v21
  %v162 = vunpack.c.l.b16 %v22
  %v163 = vunpack.c.l.b16 %v23
  %v164 = vunpack.c.l.b16 %v24
  %v165 = vunpack.c.l.b16 %v25
  %v166 = vunpack.c.l.b16 %v26
  %v167 = vunpack.c.l.b16 %v27
  %v168 = vunpack.c.l.b16 %v28
  %v169 = vunpack.c.l.b16 %v29
  %v170 = vunpack.c.l.b16 %v30
  %v171 = vunpack.c.l.b16 %v31
  %v172 = vunpack.c.l.b16 %v32
  %v173 = vunpack.c.l.b16 %v33
  %v174 = vunpack.c.l.b16 %v34
  %v175 = vunpack.c.l.b16 %v35
  %v176 = vunpack.c.l.b16 %v36
  %v177 = vunpack.c.l.b16 %v37
  %v178 = vunpack.c.l.b16 %v38
  %v179 = vunpack.c.l.b16 %v39
  %v180 = vunpack.c.l.b16 %v40
  %v181 = vunpack.c.l.b16 %v41
  %v182 = vunpack.c.l.b16 %v42
  %v183 = vunpack.c.l.b16 %v43
  %v184 = vunpack.c.l.b16 %v44
  %v185 = vunpack.c.l.b16 %v45
  %v186 = vunpack.c.l.b16 %v46
  %v187 = vunpack.c.l.b16 %v47
  %v188 = vunpack.c.l.b16 %v48
  %v189 = vunpack.c.l.b16 %v49
  %v190 = vunpack.c.l.b16 %v50
  %v191 = vunpack.c.l.b16 %v51
  %v192 = vunpack.c.l.b16 %v52
  %v193 = vunpack.c.l.b16 %v53
  %v194 = vunpack.c.l.b16 %v54
  %v195 = vunpack.c.l.b16 %v55
  %v196 = vunpack.c.l.b16 %v56
  %v197 = vunpack.c.l.b16 %v57
  %v198 = vunpack.c.l.b16 %v58
  %v199 = vunpack.c.l.b16 %v59
  %v200 = vunpack.c.l.b16 %v60
  %v201 = vunpack.c.l.b16 %v61
  %v202 = vunpack.c.l.b16 %v62
  %v203 = vunpack.c.l.b16 %v63
  %v204 = vunpack.c.l.b16 %v64
  %v205 = vunpack.c.l.b16 %v65
  %v206 = vunpack.c.l.b16 %v66
  %v207 = vunpack.c.l.b16 %v67
  %v208 = vunpack.c.l.b16 %v68
  %v209 = vunpack.c.l.b16 %v69
  %v210 = vunpack.c.l.b16 %v70
  %v211 = vunpack.c.l.b16 %v71
  %v212 = vunpack.c.l.b16 %v72
  %v213 = vunpack.c.l.b16 %v73
  %v214 = vunpack.c.l.b16 %v74
  %v215 = vunpack.c.l.b16 %v75
  %v216 = vunpack.c.l.b16 %v76
  %v217 = vunpack.c.l.b16 %v77
  %v218 = vunpack.c.l.b16 %v78
  %v219 = vunpack.c.l.b16 %v79
  %v220 = vunpack.c.l.b16 %v80
  %v221 = vunpack.c.l.b16 %v81
  %v222 = vunpack.c.l.b16 %v82
  %v223 = vunpack.c.l.b16 %v83
  %v224 = vunpack.c.l.b16 %v84
  %v225 = vpack.c.b16 %v162, %v161
  %v226 = vpack.c.b16 %v164, %v163
  %v227 = vpack.c.b16 %v166, %v165
  %v228 = vpack.c.b16 %v168, %v167
  %v229 = vpack.c.b16 %v170, %v169
  %v230 = vpack.c.b16 %v172, %v171
  %v231 = vpack.c.b16 %v174, %v173
  %v232 = vpack.c.b16 %v176, %v175
  %v233 = vpack.c.b16 %v178, %v177
  %v234 = vpack.c.b16 %v180, %v179
  %v235 = vpack.c.b16 %v182, %v181
  %v236 = vpack.c.b16 %v184, %v183
  %v237 = vpack.c.b16 %v186, %v185
  %v238 = vpack.c.b16 %v188, %v187
  %v239 = vpack.c.b16 %v190, %v189
  %v240 = vpack.c.b16 %v192, %v191
  %v241 = vpack.c.b16 %v194, %v193
  %v242 = vpack.c.b16 %v196, %v195
  %v243 = vpack.c.b16 %v198, %v197
  %v244 = vpack.c.b16 %v200, %v199
  %v245 = vpack.c.b16 %v202, %v201
  %v246 = vpack.c.b16 %v204, %v203
  %v247 = vpack.c.b16 %v206, %v205
  %v248 = vpack.c.b16 %v208, %v207
  %v249 = vpack.c.b16 %v210, %v209
  %v250 = vpack.c.b16 %v212, %v211
  %v251 = vpack.c.b16 %v214, %v213
  %v252 = vpack.c.b16 %v216, %v215
  %v253 = vpack.c.b16 %v218, %v217
  %v254 = vpack.c.b16 %v220, %v219
  %v255 = vpack.c.b16 %v222, %v221
  %v256 = vpack.c.b16 %v224, %v223
  %v262 = vunpack.c.l.b16 %v85
  %v263 = vunpack.c.l.b16 %v86
  %v264 = vunpack.c.l.b16 %v87
  %v265 = vunpack.c.l.b16 %v88
  %v266 = vunpack.c.l.b16 %v89
  %v267 = vpack.c.b16 %v263, %v262
  %v268 = vpack.c.b16 %v265, %v264
  %v269 = vpack.c.b16 %v266, %v266
  %vm272 = vcmask 293888
  %v274 = vsel %vm272, %v225, 0
  %v277 = vsel %vm272, %v226, 0
  %v280 = vsel %vm272, %v227, 0
  %v283 = vsel %vm272, %v228, 0
  %v286 = vsel %vm272, %v229, 0
  %v289 = vsel %vm272, %v230, 0
  %v292 = vsel %vm272, %v231, 0
  %v295 = vsel %vm272, %v232, 0
  %v298 = vsel %vm272, %v233, 0
  %v301 = vsel %vm272, %v234, 0
  %v304 = vsel %vm272, %v235, 0
  %v307 = vsel %vm272, %v236, 0
  %v310 = vsel %vm272, %v237, 0
  %v313 = vsel %vm272, %v238, 0
  %v316 = vsel %vm272, %v239, 0
  %v319 = vsel %vm272, %v240, 0
  %v322 = vsel %vm272, %v241, 0
  %v325 = vsel %vm272, %v242, 0
  %v328 = vsel %vm272, %v243, 0
  %v331 = vsel %vm272, %v244, 0
  %v334 = vsel %vm272, %v245, 0
  %v337 = vsel %vm272, %v246, 0
  %v340 = vsel %vm272, %v247, 0
  %v343 = vsel %vm272, %v248, 0
  %v346 = vsel %vm272, %v249, 0
  %v349 = vsel %vm272, %v250, 0
  %v352 = vsel %vm272, %v251, 0
  %v355 = vsel %vm272, %v252, 0
  %v358 = vsel %vm272, %v253, 0
  %v361 = vsel %vm272, %v254, 0
  %v364 = vsel %vm272, %v255, 0
  %v367 = vsel %vm272, %v256, 0
  %vm369 = vcmask 1041408
  %v371 = vsel %vm369, %v269, 0
  %373 = vmatprep.subr.bf16.mxu0 0
  %374 = vmatpush1.bf16.msra.mxu0 0
  %375 = vmatprep.subr.bf16.mxu0 0
  %376 = vmatpush1.bf16.msra.mxu0 0
  %377 = vmatprep.subr.bf16.mxu0 0
  %378 = vmatpush1.bf16.msra.mxu0 0
  %379 = vmatprep.subr.bf16.mxu0 0
  %380 = vmatpush1.bf16.msra.mxu0 0
  %381 = vmatprep.subr.bf16.mxu0 0
  %382 = vmatpush1.bf16.msra.mxu0 0
  %383 = vmatprep.subr.bf16.mxu0 0
  %384 = vmatpush1.bf16.msra.mxu0 %v371
  %385 = vmatprep.subr.bf16.mxu0 0
  %386 = vmatpush1.bf16.msra.mxu0 %v268
  %387 = vmatprep.subr.bf16.mxu0 0
  %388 = vmatpush1.bf16.msra.mxu0 %v267
  %389 = vmatprep.subr.bf16.mxu0 0
  %390 = vmatpush2.bf16.msra.mxu0 0
  %391 = vmatprep.subr.bf16.mxu0 0
  %392 = vmatpush2.bf16.msra.mxu0 0
  %393 = vmatprep.subr.bf16.mxu0 0
  %394 = vmatpush2.bf16.msra.mxu0 0
  %395 = vmatprep.subr.bf16.mxu0 0
  %396 = vmatpush2.bf16.msra.mxu0 0
  %397 = vmatprep.subr.bf16.mxu0 0
  %398 = vmatpush2.bf16.msra.mxu0 0
  %399 = vmatprep.subr.bf16.mxu0 0
  %400 = vmatpush2.bf16.msra.mxu0 0
  %401 = vmatprep.subr.bf16.mxu0 0
  %402 = vmatpush2.bf16.msra.mxu0 0
  %403 = vmatprep.subr.bf16.mxu0 0
  %404 = vmatpush2.bf16.msra.mxu0 0
  %405 = vmatprep.mubr.bf16.mxu0 0
  %406 = vmatmul.mubr.bf16.gmra.mxu0 %v274
  %v407 = vpop.f32.mrf.mxu0
  %v408 = vadd.f32 %v95, %v407
  %v409 = vpop.f32.mrf.mxu0
  %v410 = vpop.f32.mrf.mxu0
  %v411 = vadd.f32 %v95, %v410
  %v412 = vpop.f32.mrf.mxu0
  %413 = vmatprep.mubr.bf16.mxu0 0
  %414 = vmatmul.mubr.bf16.gmra.mxu0 %v277
  %v415 = vpop.f32.mrf.mxu0
  %v416 = vadd.f32 %v95, %v415
  %v417 = vpop.f32.mrf.mxu0
  %v418 = vpop.f32.mrf.mxu0
  %v419 = vadd.f32 %v95, %v418
  %v420 = vpop.f32.mrf.mxu0
  %421 = vmatprep.mubr.bf16.mxu0 0
  %422 = vmatmul.mubr.bf16.gmra.mxu0 %v280
  %v423 = vpop.f32.mrf.mxu0
  %v424 = vadd.f32 %v95, %v423
  %v425 = vpop.f32.mrf.mxu0
  %v426 = vpop.f32.mrf.mxu0
  %v427 = vadd.f32 %v95, %v426
  %v428 = vpop.f32.mrf.mxu0
  %429 = vmatprep.mubr.bf16.mxu0 0
  %430 = vmatmul.mubr.bf16.gmra.mxu0 %v283
  %v431 = vpop.f32.mrf.mxu0
  %v432 = vadd.f32 %v95, %v431
  %v433 = vpop.f32.mrf.mxu0
  %v434 = vpop.f32.mrf.mxu0
  %v435 = vadd.f32 %v95, %v434
  %v436 = vpop.f32.mrf.mxu0
  %437 = vmatprep.mubr.bf16.mxu0 0
  %438 = vmatmul.mubr.bf16.gmra.mxu0 %v286
  %v439 = vpop.f32.mrf.mxu0
  %v440 = vadd.f32 %v95, %v439
  %v441 = vpop.f32.mrf.mxu0
  %v442 = vpop.f32.mrf.mxu0
  %v443 = vadd.f32 %v95, %v442
  %v444 = vpop.f32.mrf.mxu0
  %445 = vmatprep.mubr.bf16.mxu0 0
  %446 = vmatmul.mubr.bf16.gmra.mxu0 %v289
  %v447 = vpop.f32.mrf.mxu0
  %v448 = vadd.f32 %v95, %v447
  %v449 = vpop.f32.mrf.mxu0
  %v450 = vpop.f32.mrf.mxu0
  %v451 = vadd.f32 %v95, %v450
  %v452 = vpop.f32.mrf.mxu0
  %453 = vmatprep.mubr.bf16.mxu0 0
  %454 = vmatmul.mubr.bf16.gmra.mxu0 %v292
  %v455 = vpop.f32.mrf.mxu0
  %v456 = vadd.f32 %v95, %v455
  %v457 = vpop.f32.mrf.mxu0
  %v458 = vpop.f32.mrf.mxu0
  %v459 = vadd.f32 %v95, %v458
  %v460 = vpop.f32.mrf.mxu0
  %461 = vmatprep.mubr.bf16.mxu0 0
  %462 = vmatmul.mubr.bf16.gmra.mxu0 %v295
  %v463 = vpop.f32.mrf.mxu0
  %v464 = vadd.f32 %v95, %v463
  %v465 = vpop.f32.mrf.mxu0
  %v466 = vpop.f32.mrf.mxu0
  %v467 = vadd.f32 %v95, %v466
  %v468 = vpop.f32.mrf.mxu0
  %469 = vmatprep.mubr.bf16.mxu0 0
  %470 = vmatmul.mubr.bf16.gmra.mxu0 %v298
  %v471 = vpop.f32.mrf.mxu0
  %v472 = vadd.f32 %v95, %v471
  %v473 = vpop.f32.mrf.mxu0
  %v474 = vpop.f32.mrf.mxu0
  %v475 = vadd.f32 %v95, %v474
  %v476 = vpop.f32.mrf.mxu0
  %477 = vmatprep.mubr.bf16.mxu0 0
  %478 = vmatmul.mubr.bf16.gmra.mxu0 %v301
  %v479 = vpop.f32.mrf.mxu0
  %v480 = vadd.f32 %v95, %v479
  %v481 = vpop.f32.mrf.mxu0
  %v482 = vpop.f32.mrf.mxu0
  %v483 = vadd.f32 %v95, %v482
  %v484 = vpop.f32.mrf.mxu0
  %485 = vmatprep.mubr.bf16.mxu0 0
  %486 = vmatmul.mubr.bf16.gmra.mxu0 %v304
  %v487 = vpop.f32.mrf.mxu0
  %v488 = vadd.f32 %v95, %v487
  %v489 = vpop.f32.mrf.mxu0
  %v490 = vpop.f32.mrf.mxu0
  %v491 = vadd.f32 %v95, %v490
  %v492 = vpop.f32.mrf.mxu0
  %493 = vmatprep.mubr.bf16.mxu0 0
  %494 = vmatmul.mubr.bf16.gmra.mxu0 %v307
  %v495 = vpop.f32.mrf.mxu0
  %v496 = vadd.f32 %v95, %v495
  %v497 = vpop.f32.mrf.mxu0
  %v498 = vpop.f32.mrf.mxu0
  %v499 = vadd.f32 %v95, %v498
  %v500 = vpop.f32.mrf.mxu0
  %501 = vmatprep.mubr.bf16.mxu0 0
  %502 = vmatmul.mubr.bf16.gmra.mxu0 %v310
  %v503 = vpop.f32.mrf.mxu0
  %v504 = vadd.f32 %v95, %v503
  %v505 = vpop.f32.mrf.mxu0
  %v506 = vpop.f32.mrf.mxu0
  %v507 = vadd.f32 %v95, %v506
  %v508 = vpop.f32.mrf.mxu0
  %509 = vmatprep.mubr.bf16.mxu0 0
  %510 = vmatmul.mubr.bf16.gmra.mxu0 %v313
  %v511 = vpop.f32.mrf.mxu0
  %v512 = vadd.f32 %v95, %v511
  %v513 = vpop.f32.mrf.mxu0
  %v514 = vpop.f32.mrf.mxu0
  %v515 = vadd.f32 %v95, %v514
  %v516 = vpop.f32.mrf.mxu0
  %517 = vmatprep.mubr.bf16.mxu0 0
  %518 = vmatmul.mubr.bf16.gmra.mxu0 %v316
  %v519 = vpop.f32.mrf.mxu0
  %v520 = vadd.f32 %v95, %v519
  %v521 = vpop.f32.mrf.mxu0
  %v522 = vpop.f32.mrf.mxu0
  %v523 = vadd.f32 %v95, %v522
  %v524 = vpop.f32.mrf.mxu0
  %525 = vmatprep.mubr.bf16.mxu0 0
  %526 = vmatmul.mubr.bf16.gmra.mxu0 %v319
  %v527 = vpop.f32.mrf.mxu0
  %v528 = vadd.f32 %v95, %v527
  %v529 = vpop.f32.mrf.mxu0
  %v530 = vpop.f32.mrf.mxu0
  %v531 = vadd.f32 %v95, %v530
  %v532 = vpop.f32.mrf.mxu0
  %533 = vmatprep.mubr.bf16.mxu0 0
  %534 = vmatmul.mubr.bf16.gmra.mxu0 %v322
  %v535 = vpop.f32.mrf.mxu0
  %v536 = vadd.f32 %v95, %v535
  %v537 = vpop.f32.mrf.mxu0
  %v538 = vpop.f32.mrf.mxu0
  %v539 = vadd.f32 %v95, %v538
  %v540 = vpop.f32.mrf.mxu0
  %541 = vmatprep.mubr.bf16.mxu0 0
  %542 = vmatmul.mubr.bf16.gmra.mxu0 %v325
  %v543 = vpop.f32.mrf.mxu0
  %v544 = vadd.f32 %v95, %v543
  %v545 = vpop.f32.mrf.mxu0
  %v546 = vpop.f32.mrf.mxu0
  %v547 = vadd.f32 %v95, %v546
  %v548 = vpop.f32.mrf.mxu0
  %549 = vmatprep.mubr.bf16.mxu0 0
  %550 = vmatmul.mubr.bf16.gmra.mxu0 %v328
  %v551 = vpop.f32.mrf.mxu0
  %v552 = vadd.f32 %v95, %v551
  %v553 = vpop.f32.mrf.mxu0
  %v554 = vpop.f32.mrf.mxu0
  %v555 = vadd.f32 %v95, %v554
  %v556 = vpop.f32.mrf.mxu0
  %557 = vmatprep.mubr.bf16.mxu0 0
  %558 = vmatmul.mubr.bf16.gmra.mxu0 %v331
  %v559 = vpop.f32.mrf.mxu0
  %v560 = vadd.f32 %v95, %v559
  %v561 = vpop.f32.mrf.mxu0
  %v562 = vpop.f32.mrf.mxu0
  %v563 = vadd.f32 %v95, %v562
  %v564 = vpop.f32.mrf.mxu0
  %565 = vmatprep.mubr.bf16.mxu0 0
  %566 = vmatmul.mubr.bf16.gmra.mxu0 %v334
  %v567 = vpop.f32.mrf.mxu0
  %v568 = vadd.f32 %v95, %v567
  %v569 = vpop.f32.mrf.mxu0
  %v570 = vpop.f32.mrf.mxu0
  %v571 = vadd.f32 %v95, %v570
  %v572 = vpop.f32.mrf.mxu0
  %573 = vmatprep.mubr.bf16.mxu0 0
  %574 = vmatmul.mubr.bf16.gmra.mxu0 %v337
  %v575 = vpop.f32.mrf.mxu0
  %v576 = vadd.f32 %v95, %v575
  %v577 = vpop.f32.mrf.mxu0
  %v578 = vpop.f32.mrf.mxu0
  %v579 = vadd.f32 %v95, %v578
  %v580 = vpop.f32.mrf.mxu0
  %581 = vmatprep.mubr.bf16.mxu0 0
  %582 = vmatmul.mubr.bf16.gmra.mxu0 %v340
  %v583 = vpop.f32.mrf.mxu0
  %v584 = vadd.f32 %v95, %v583
  %v585 = vpop.f32.mrf.mxu0
  %v586 = vpop.f32.mrf.mxu0
  %v587 = vadd.f32 %v95, %v586
  %v588 = vpop.f32.mrf.mxu0
  %589 = vmatprep.mubr.bf16.mxu0 0
  %590 = vmatmul.mubr.bf16.gmra.mxu0 %v343
  %v591 = vpop.f32.mrf.mxu0
  %v592 = vadd.f32 %v95, %v591
  %v593 = vpop.f32.mrf.mxu0
  %v594 = vpop.f32.mrf.mxu0
  %v595 = vadd.f32 %v95, %v594
  %v596 = vpop.f32.mrf.mxu0
  %597 = vmatprep.mubr.bf16.mxu0 0
  %598 = vmatmul.mubr.bf16.gmra.mxu0 %v346
  %v599 = vpop.f32.mrf.mxu0
  %v600 = vadd.f32 %v95, %v599
  %v601 = vpop.f32.mrf.mxu0
  %v602 = vpop.f32.mrf.mxu0
  %v603 = vadd.f32 %v95, %v602
  %v604 = vpop.f32.mrf.mxu0
  %605 = vmatprep.mubr.bf16.mxu0 0
  %606 = vmatmul.mubr.bf16.gmra.mxu0 %v349
  %v607 = vpop.f32.mrf.mxu0
  %v608 = vadd.f32 %v95, %v607
  %v609 = vpop.f32.mrf.mxu0
  %v610 = vpop.f32.mrf.mxu0
  %v611 = vadd.f32 %v95, %v610
  %v612 = vpop.f32.mrf.mxu0
  %613 = vmatprep.mubr.bf16.mxu0 0
  %614 = vmatmul.mubr.bf16.gmra.mxu0 %v352
  %v615 = vpop.f32.mrf.mxu0
  %v616 = vadd.f32 %v95, %v615
  %v617 = vpop.f32.mrf.mxu0
  %v618 = vpop.f32.mrf.mxu0
  %v619 = vadd.f32 %v95, %v618
  %v620 = vpop.f32.mrf.mxu0
  %621 = vmatprep.mubr.bf16.mxu0 0
  %622 = vmatmul.mubr.bf16.gmra.mxu0 %v355
  %v623 = vpop.f32.mrf.mxu0
  %v624 = vadd.f32 %v95, %v623
  %v625 = vpop.f32.mrf.mxu0
  %v626 = vpop.f32.mrf.mxu0
  %v627 = vadd.f32 %v95, %v626
  %v628 = vpop.f32.mrf.mxu0
  %629 = vmatprep.mubr.bf16.mxu0 0
  %630 = vmatmul.mubr.bf16.gmra.mxu0 %v358
  %v631 = vpop.f32.mrf.mxu0
  %v632 = vadd.f32 %v95, %v631
  %v633 = vpop.f32.mrf.mxu0
  %v634 = vpop.f32.mrf.mxu0
  %v635 = vadd.f32 %v95, %v634
  %v636 = vpop.f32.mrf.mxu0
  %637 = vmatprep.mubr.bf16.mxu0 0
  %638 = vmatmul.mubr.bf16.gmra.mxu0 %v361
  %v639 = vpop.f32.mrf.mxu0
  %v640 = vadd.f32 %v95, %v639
  %v641 = vpop.f32.mrf.mxu0
  %v642 = vpop.f32.mrf.mxu0
  %v643 = vadd.f32 %v95, %v642
  %v644 = vpop.f32.mrf.mxu0
  %645 = vmatprep.mubr.bf16.mxu0 0
  %646 = vmatmul.mubr.bf16.gmra.mxu0 %v364
  %v647 = vpop.f32.mrf.mxu0
  %v648 = vadd.f32 %v95, %v647
  %v649 = vpop.f32.mrf.mxu0
  %v650 = vpop.f32.mrf.mxu0
  %v651 = vadd.f32 %v95, %v650
  %v652 = vpop.f32.mrf.mxu0
  %653 = vmatprep.mubr.bf16.mxu0 0
  %654 = vmatmul.mubr.bf16.gmra.mxu0 %v367
  %v655 = vpop.f32.mrf.mxu0
  %v656 = vadd.f32 %v95, %v655
  %v657 = vpop.f32.mrf.mxu0
  %v658 = vpop.f32.mrf.mxu0
  %v659 = vadd.f32 %v95, %v658
  %v660 = vpop.f32.mrf.mxu0
  %661 = vdwg.mxu0
  %v662 = vmax.f32 %v408, 0.0
  %v663 = vmax.f32 %v411, 0.0
  %v664 = vmax.f32 %v416, 0.0
  %v665 = vmax.f32 %v419, 0.0
  %v666 = vmax.f32 %v424, 0.0
  %v667 = vmax.f32 %v427, 0.0
  %v668 = vmax.f32 %v432, 0.0
  %v669 = vmax.f32 %v435, 0.0
  %v670 = vmax.f32 %v440, 0.0
  %v671 = vmax.f32 %v443, 0.0
  %v672 = vmax.f32 %v448, 0.0
  %v673 = vmax.f32 %v451, 0.0
  %v674 = vmax.f32 %v456, 0.0
  %v675 = vmax.f32 %v459, 0.0
  %v676 = vmax.f32 %v464, 0.0
  %v677 = vmax.f32 %v467, 0.0
  %v678 = vmax.f32 %v472, 0.0
  %v679 = vmax.f32 %v475, 0.0
  %v680 = vmax.f32 %v480, 0.0
  %v681 = vmax.f32 %v483, 0.0
  %v682 = vmax.f32 %v488, 0.0
  %v683 = vmax.f32 %v491, 0.0
  %v684 = vmax.f32 %v496, 0.0
  %v685 = vmax.f32 %v499, 0.0
  %v686 = vmax.f32 %v504, 0.0
  %v687 = vmax.f32 %v507, 0.0
  %v688 = vmax.f32 %v512, 0.0
  %v689 = vmax.f32 %v515, 0.0
  %v690 = vmax.f32 %v520, 0.0
  %v691 = vmax.f32 %v523, 0.0
  %v692 = vmax.f32 %v528, 0.0
  %v693 = vmax.f32 %v531, 0.0
  %v694 = vmax.f32 %v536, 0.0
  %v695 = vmax.f32 %v539, 0.0
  %v696 = vmax.f32 %v544, 0.0
  %v697 = vmax.f32 %v547, 0.0
  %v698 = vmax.f32 %v552, 0.0
  %v699 = vmax.f32 %v555, 0.0
  %v700 = vmax.f32 %v560, 0.0
  %v701 = vmax.f32 %v563, 0.0
  %v702 = vmax.f32 %v568, 0.0
  %v703 = vmax.f32 %v571, 0.0
  %v704 = vmax.f32 %v576, 0.0
  %v705 = vmax.f32 %v579, 0.0
  %v706 = vmax.f32 %v584, 0.0
  %v707 = vmax.f32 %v587, 0.0
  %v708 = vmax.f32 %v592, 0.0
  %v709 = vmax.f32 %v595, 0.0
  %v710 = vmax.f32 %v600, 0.0
  %v711 = vmax.f32 %v603, 0.0
  %v712 = vmax.f32 %v608, 0.0
  %v713 = vmax.f32 %v611, 0.0
  %v714 = vmax.f32 %v616, 0.0
  %v715 = vmax.f32 %v619, 0.0
  %v716 = vmax.f32 %v624, 0.0
  %v717 = vmax.f32 %v627, 0.0
  %v718 = vmax.f32 %v632, 0.0
  %v719 = vmax.f32 %v635, 0.0
  %v720 = vmax.f32 %v640, 0.0
  %v721 = vmax.f32 %v643, 0.0
  %v722 = vmax.f32 %v648, 0.0
  %v723 = vmax.f32 %v651, 0.0
  %v724 = vmax.f32 %v656, 0.0
  %v725 = vmax.f32 %v659, 0.0
  %vm726 = vcmask 261120
  %v727 = vsel %vm726, %v662, 0.0
  %v728 = vsel %vm726, %v663, 0.0
  %v729 = vadd.f32 %v727, %v728
  %v730 = vsel %vm726, %v664, 0.0
  %v731 = vadd.f32 %v729, %v730
  %v732 = vsel %vm726, %v665, 0.0
  %v733 = vadd.f32 %v731, %v732
  %v734 = vsel %vm726, %v666, 0.0
  %v735 = vadd.f32 %v733, %v734
  %v736 = vsel %vm726, %v667, 0.0
  %v737 = vadd.f32 %v735, %v736
  %v738 = vsel %vm726, %v668, 0.0
  %v739 = vadd.f32 %v737, %v738
  %v740 = vsel %vm726, %v669, 0.0
  %v741 = vadd.f32 %v739, %v740
  %v742 = vsel %vm726, %v670, 0.0
  %v743 = vadd.f32 %v741, %v742
  %v744 = vsel %vm726, %v671, 0.0
  %v745 = vadd.f32 %v743, %v744
  %v746 = vsel %vm726, %v672, 0.0
  %v747 = vadd.f32 %v745, %v746
  %v748 = vsel %vm726, %v673, 0.0
  %v749 = vadd.f32 %v747, %v748
  %v750 = vsel %vm726, %v674, 0.0
  %v751 = vadd.f32 %v749, %v750
  %v752 = vsel %vm726, %v675, 0.0
  %v753 = vadd.f32 %v751, %v752
  %v754 = vsel %vm726, %v676, 0.0
  %v755 = vadd.f32 %v753, %v754
  %v756 = vsel %vm726, %v677, 0.0
  %v757 = vadd.f32 %v755, %v756
  %v758 = vsel %vm726, %v678, 0.0
  %v759 = vadd.f32 %v757, %v758
  %v760 = vsel %vm726, %v679, 0.0
  %v761 = vadd.f32 %v759, %v760
  %v762 = vsel %vm726, %v680, 0.0
  %v763 = vadd.f32 %v761, %v762
  %v764 = vsel %vm726, %v681, 0.0
  %v765 = vadd.f32 %v763, %v764
  %v766 = vsel %vm726, %v682, 0.0
  %v767 = vadd.f32 %v765, %v766
  %v768 = vsel %vm726, %v683, 0.0
  %v769 = vadd.f32 %v767, %v768
  %v770 = vsel %vm726, %v684, 0.0
  %v771 = vadd.f32 %v769, %v770
  %v772 = vsel %vm726, %v685, 0.0
  %v773 = vadd.f32 %v771, %v772
  %v774 = vsel %vm726, %v686, 0.0
  %v775 = vadd.f32 %v773, %v774
  %v776 = vsel %vm726, %v687, 0.0
  %v777 = vadd.f32 %v775, %v776
  %v778 = vsel %vm726, %v688, 0.0
  %v779 = vadd.f32 %v777, %v778
  %v780 = vsel %vm726, %v689, 0.0
  %v781 = vadd.f32 %v779, %v780
  %v782 = vsel %vm726, %v690, 0.0
  %v783 = vadd.f32 %v781, %v782
  %v784 = vsel %vm726, %v691, 0.0
  %v785 = vadd.f32 %v783, %v784
  %v786 = vsel %vm726, %v692, 0.0
  %v787 = vadd.f32 %v785, %v786
  %v788 = vsel %vm726, %v693, 0.0
  %v789 = vadd.f32 %v787, %v788
  %v790 = vrot.slane %v789, 4
  %v791 = vadd.f32 %v789, %v790
  %v792 = vrot.slane %v791, 2
  %v793 = vadd.f32 %v791, %v792
  %v794 = vrot.slane %v793, 1
  %v795 = vadd.f32 %v793, %v794
  %v796 = vsel %vm726, %v694, 0.0
  %v797 = vsel %vm726, %v695, 0.0
  %v798 = vadd.f32 %v796, %v797
  %v799 = vsel %vm726, %v696, 0.0
  %v800 = vadd.f32 %v798, %v799
  %v801 = vsel %vm726, %v697, 0.0
  %v802 = vadd.f32 %v800, %v801
  %v803 = vsel %vm726, %v698, 0.0
  %v804 = vadd.f32 %v802, %v803
  %v805 = vsel %vm726, %v699, 0.0
  %v806 = vadd.f32 %v804, %v805
  %v807 = vsel %vm726, %v700, 0.0
  %v808 = vadd.f32 %v806, %v807
  %v809 = vsel %vm726, %v701, 0.0
  %v810 = vadd.f32 %v808, %v809
  %v811 = vsel %vm726, %v702, 0.0
  %v812 = vadd.f32 %v810, %v811
  %v813 = vsel %vm726, %v703, 0.0
  %v814 = vadd.f32 %v812, %v813
  %v815 = vsel %vm726, %v704, 0.0
  %v816 = vadd.f32 %v814, %v815
  %v817 = vsel %vm726, %v705, 0.0
  %v818 = vadd.f32 %v816, %v817
  %v819 = vsel %vm726, %v706, 0.0
  %v820 = vadd.f32 %v818, %v819
  %v821 = vsel %vm726, %v707, 0.0
  %v822 = vadd.f32 %v820, %v821
  %v823 = vsel %vm726, %v708, 0.0
  %v824 = vadd.f32 %v822, %v823
  %v825 = vsel %vm726, %v709, 0.0
  %v826 = vadd.f32 %v824, %v825
  %v827 = vsel %vm726, %v710, 0.0
  %v828 = vadd.f32 %v826, %v827
  %v829 = vsel %vm726, %v711, 0.0
  %v830 = vadd.f32 %v828, %v829
  %v831 = vsel %vm726, %v712, 0.0
  %v832 = vadd.f32 %v830, %v831
  %v833 = vsel %vm726, %v713, 0.0
  %v834 = vadd.f32 %v832, %v833
  %v835 = vsel %vm726, %v714, 0.0
  %v836 = vadd.f32 %v834, %v835
  %v837 = vsel %vm726, %v715, 0.0
  %v838 = vadd.f32 %v836, %v837
  %v839 = vsel %vm726, %v716, 0.0
  %v840 = vadd.f32 %v838, %v839
  %v841 = vsel %vm726, %v717, 0.0
  %v842 = vadd.f32 %v840, %v841
  %v843 = vsel %vm726, %v718, 0.0
  %v844 = vadd.f32 %v842, %v843
  %v845 = vsel %vm726, %v719, 0.0
  %v846 = vadd.f32 %v844, %v845
  %v847 = vsel %vm726, %v720, 0.0
  %v848 = vadd.f32 %v846, %v847
  %v849 = vsel %vm726, %v721, 0.0
  %v850 = vadd.f32 %v848, %v849
  %v851 = vsel %vm726, %v722, 0.0
  %v852 = vadd.f32 %v850, %v851
  %v853 = vsel %vm726, %v723, 0.0
  %v854 = vadd.f32 %v852, %v853
  %v855 = vsel %vm726, %v724, 0.0
  %v856 = vadd.f32 %v854, %v855
  %v857 = vsel %vm726, %v725, 0.0
  %v858 = vadd.f32 %v856, %v857
  %v859 = vrot.slane %v858, 4
  %v860 = vadd.f32 %v858, %v859
  %v861 = vrot.slane %v860, 2
  %v862 = vadd.f32 %v860, %v861
  %v863 = vrot.slane %v862, 1
  %v864 = vadd.f32 %v862, %v863
  %v865 = vld [vmem:[%s3] sm:$0xff]
  %v866 = vld [vmem:[%s3 + $0x8] sm:$0xff]
  %v867 = vld [vmem:[%s3 + $0x10] sm:$0xff]
  %v868 = vld [vmem:[%s3 + $0x18] sm:$0xff]
  %v869 = vld [vmem:[%s4] sm:$0x1]
  %v871 = vlaneseq
  %v872 = vshrl.u32 %v871, 7
  %v873 = vsub.s32 0, %v872
  %v874 = vrot.slane %v869, %v873
  %vm878 = vcmask 1041409
  %v879 = vsel %vm878, %v864, %v795
  %v880 = vsel %vm726, %v879, 0
  %882 = vmatprep.subr.mxu0 0.0
  %883 = vmatpush1.msra.mxu0 0.0
  %884 = vmatprep.subr.mxu0 0.0
  %885 = vmatpush1.msra.mxu0 0.0
  %886 = vmatprep.subr.mxu0 0.0
  %887 = vmatpush1.msra.mxu0 0.0
  %888 = vmatprep.subr.mxu0 0.0
  %889 = vmatpush1.msra.mxu0 0.0
  %890 = vmatprep.subr.mxu0 0.0
  %891 = vmatpush1.msra.mxu0 0.0
  %892 = vmatprep.subr.mxu0 0.0
  %893 = vmatpush1.msra.mxu0 0.0
  %894 = vmatprep.subr.mxu0 0.0
  %895 = vmatpush1.msra.mxu0 0.0
  %896 = vmatprep.subr.mxu0 0.0
  %897 = vmatpush1.msra.mxu0 0.0
  %898 = vmatprep.subr.mxu0 0.0
  %899 = vmatpush1.msra.mxu0 0.0
  %900 = vmatprep.subr.mxu0 0.0
  %901 = vmatpush1.msra.mxu0 0.0
  %902 = vmatprep.subr.mxu0 0.0
  %903 = vmatpush1.msra.mxu0 0.0
  %904 = vmatprep.subr.mxu0 0.0
  %905 = vmatpush1.msra.mxu0 0.0
  %906 = vmatprep.subr.mxu0 0.0
  %907 = vmatpush1.msra.mxu0 %v868
  %908 = vmatprep.subr.mxu0 0.0
  %909 = vmatpush1.msra.mxu0 %v867
  %910 = vmatprep.subr.mxu0 0.0
  %911 = vmatpush1.msra.mxu0 %v866
  %912 = vmatprep.subr.mxu0 0.0
  %913 = vmatpush1.msra.mxu0 %v865
  %914 = vmatprep.subr.mxu0 0.0
  %915 = vmatpush2.msra.mxu0 0.0
  %916 = vmatprep.subr.mxu0 0.0
  %917 = vmatpush2.msra.mxu0 0.0
  %918 = vmatprep.subr.mxu0 0.0
  %919 = vmatpush2.msra.mxu0 0.0
  %920 = vmatprep.subr.mxu0 0.0
  %921 = vmatpush2.msra.mxu0 0.0
  %922 = vmatprep.subr.mxu0 0.0
  %923 = vmatpush2.msra.mxu0 0.0
  %924 = vmatprep.subr.mxu0 0.0
  %925 = vmatpush2.msra.mxu0 0.0
  %926 = vmatprep.subr.mxu0 0.0
  %927 = vmatpush2.msra.mxu0 0.0
  %928 = vmatprep.subr.mxu0 0.0
  %929 = vmatpush2.msra.mxu0 0.0
  %930 = vmatprep.subr.mxu0 0.0
  %931 = vmatpush2.msra.mxu0 0.0
  %932 = vmatprep.subr.mxu0 0.0
  %933 = vmatpush2.msra.mxu0 0.0
  %934 = vmatprep.subr.mxu0 0.0
  %935 = vmatpush2.msra.mxu0 0.0
  %936 = vmatprep.subr.mxu0 0.0
  %937 = vmatpush2.msra.mxu0 0.0
  %938 = vmatprep.subr.mxu0 0.0
  %939 = vmatpush2.msra.mxu0 0.0
  %940 = vmatprep.subr.mxu0 0.0
  %941 = vmatpush2.msra.mxu0 0.0
  %942 = vmatprep.subr.mxu0 0.0
  %943 = vmatpush2.msra.mxu0 0.0
  %944 = vmatprep.subr.mxu0 0.0
  %945 = vmatpush2.msra.mxu0 0.0
  %946 = vmatprep.mubr.f32.mxu0 0.0
  %947 = vmatmul.mubr.f32.gmra.mxu0 %v880
  %v948 = vpop.f32.mrf.mxu0
  %v949 = vadd.f32 %v874, %v948
  %v950 = vpop.f32.mrf.mxu0
  %951 = vdwg.mxu0
  %952 = vst [vmem:[%s5] sm:$0x3] %v949
  // Predicated region
  $region22: #{etri_forward.1} parent=0 // pred_check
    _
  $region23: #{etri_forward.1} parent=0 // pred_check_branch
    %954 = sbr.rel (0) target = $region25
  $region24: #{etri_forward.1} parent=0 // pred_region
    _
  $region25: #{etri_forward.1} parent=0 // pred_fallthru
    _
  // Predicated region
  $region26: #{etri_forward.1} parent=0 // pred_check
    _
  $region27: #{etri_forward.1} parent=0 // pred_check_branch
    %956 = sbr.rel (0) target = $region29
  $region28: #{etri_forward.1} parent=0 // pred_region
    _
  $region29: #{etri_forward.1} parent=0 // pred_fallthru
    _

</llo_original>
